<compile_context>
chip_gen: v7x
topology: tpu7x:2x2x1
jax: 0.10.0
libtpu: 0.0.40
codegen_flags: <defaults>
</compile_context>

<pallas_src>
import functools
import math

import jax
import jax.numpy as jnp
from jax.experimental import pallas as pl
from jax.experimental.pallas import tpu as pltpu


def _round_up(x, m):
    return ((x + m - 1) // m) * m


# ----------------------------- fused Pallas kernel -----------------------------

def _fused_fusion_kernel(x_ref, w_ref, out_ref, *, n_mod, d_out, stride, slab):
    """Fused Q/K/V projection + modality attention + concat, single lane-dense store.

    x_ref  : [Bt, Din+1]      concatenated modality features + constant-1 column
    w_ref  : [Din+1, 3*stride] packed (block-diag) Q/K/V weights; bias = last row;
                               q at lanes [0, stride), k at [stride, 2*stride),
                               v at [2*stride, 3*stride); 1/sqrt(D) folded into q.
    out_ref: [Bt, slab]        lanes [0, N*D) = concatenated weighted values,
                               lanes [N*D, N*D + N*N) = attention weights (row-major),
                               remaining lanes = zero pad (slab % 128 == 0).
    """
    x = x_ref[...]
    nd = n_mod * d_out

    # Single MXU pass: all 9 per-modality linears collapsed into one matmul.
    y = jnp.dot(x, w_ref[...], preferred_element_type=jnp.float32)  # [Bt, 3*stride]

    # 128-aligned free views of q / k / v, then tiny per-modality lane slices
    # (n_mod is small; fully unrolled).
    qs = [y[:, n * d_out:(n + 1) * d_out] for n in range(n_mod)]
    ks = [y[:, stride + n * d_out: stride + (n + 1) * d_out] for n in range(n_mod)]
    vs = [y[:, 2 * stride + n * d_out: 2 * stride + (n + 1) * d_out]
          for n in range(n_mod)]

    out_cols = []
    attn_cols = []
    for n in range(n_mod):
        # scores[n, m] = <q_n, k_m> per batch row: VPU multiply + XLU lane reduce.
        s_nm = [jnp.sum(qs[n] * ks[m], axis=-1, keepdims=True)   # each [Bt, 1]
                for m in range(n_mod)]

        # Numerically-stable softmax over the N modality scores ([Bt, 1] columns).
        m_n = s_nm[0]
        for m in range(1, n_mod):
            m_n = jnp.maximum(m_n, s_nm[m])
        e_nm = [jnp.exp(s - m_n) for s in s_nm]
        denom = e_nm[0]
        for m in range(1, n_mod):
            denom = denom + e_nm[m]
        inv = 1.0 / denom                         # exact divide on a [Bt,1] column
        w_nm = [e * inv for e in e_nm]
        attn_cols.extend(w_nm)

        # Weighted sum over modalities: unrolled scale-and-accumulate on the VPU.
        acc = w_nm[0] * vs[0]
        for m in range(1, n_mod):
            acc = acc + w_nm[m] * vs[m]
        out_cols.append(acc)

    # Single lane-dense (multiple-of-128) store: values | attention | zero pad.
    cols = out_cols + attn_cols
    pad_lanes = slab - nd - n_mod * n_mod
    if pad_lanes > 0:
        cols.append(jnp.zeros((x.shape[0], pad_lanes), jnp.float32))
    out_ref[...] = jnp.concatenate(cols, axis=-1)                 # [Bt, slab]


# ------------------------------ parameters -------------------------------

def init_feature_fusion_params(key, input_dims, output_dim):
    """Deterministic synthetic init mirroring nn.Linear shapes.

    Weights stored transposed ([in, out]) so the math is x @ W + b, numerically
    identical to PyTorch's x @ W_pt.T + b.
    """
    params = {"query": [], "key": [], "value": []}
    for name in ("query", "key", "value"):
        for in_dim in input_dims:
            key, kw, kb = jax.random.split(key, 3)
            bound = 1.0 / (in_dim ** 0.5)
            w = jax.random.uniform(kw, (in_dim, output_dim), jnp.float32,
                                   minval=-bound, maxval=bound)
            b = jax.random.uniform(kb, (1, output_dim), jnp.float32,
                                   minval=-bound, maxval=bound)
            params[name].append((w, b))
    return params


def pack_feature_fusion_params(params, output_dim):
    """Pack all Q/K/V weights + biases into ONE block-diagonal matrix.

    Layout: [Din_total + 1, 3 * stride] with stride = round_up(N*D, 128).
      * q occupies lanes [0, N*D), k lanes [stride, stride+N*D), v likewise.
      * Row `Din_total` holds the biases (matched by a 1-column appended to x).
      * The 1/sqrt(D) attention scale is folded into the q block (host-side,
        one-time; not a per-call wrapper prescale).
    """
    d_out = int(output_dim)
    n_mod = len(params["query"])
    nd = n_mod * d_out
    stride = _round_up(nd, 128)
    din_total = sum(w.shape[0] for (w, _) in params["query"])
    scale = 1.0 / math.sqrt(float(d_out))

    w_packed = jnp.zeros((din_total + 1, 3 * stride), jnp.float32)
    for si, name in enumerate(("query", "key", "value")):
        col0 = si * stride
        s = scale if name == "query" else 1.0
        row = 0
        for i, (w, b) in enumerate(params[name]):
            c = col0 + i * d_out
            w_packed = w_packed.at[row:row + w.shape[0], c:c + d_out].set(w * s)
            w_packed = w_packed.at[din_total, c:c + d_out].set(b[0] * s)
            row += w.shape[0]

    return {"w": w_packed, "stride": stride, "n_mod": n_mod, "d_out": d_out}


# ------------------------------ forward wrapper ---------------------------

def _choose_batch_tiling(batch, max_block=512):
    """Pick (block_b, padded_batch): big tiles, but >= 2 grid steps when possible
    so the 'parallel' axis can shard across both TensorCores on v7x."""
    b_pad8 = _round_up(max(batch, 1), 8)
    block_b = min(max_block, b_pad8)
    n_blocks = pl.cdiv(b_pad8, block_b)
    if n_blocks < 2 and b_pad8 >= 16:
        n_blocks = 2
    block_b = _round_up(pl.cdiv(b_pad8, n_blocks), 8)
    return block_b, block_b * n_blocks


def feature_fusion_forward(packed, tensors, output_dim):
    n_mod = len(tensors)
    d_out = int(output_dim)
    nd = n_mod * d_out
    stride = packed["stride"]
    slab = _round_up(nd + n_mod * n_mod, 128)

    batch = tensors[0].shape[0]
    ones = jnp.ones((batch, 1), jnp.float32)                     # bias column
    x_aug = jnp.concatenate(list(tensors) + [ones], axis=1)      # [B, Din+1]
    din_aug = x_aug.shape[1]
    assert packed["w"].shape == (din_aug, 3 * stride)

    block_b, b_pad = _choose_batch_tiling(batch)
    if b_pad != batch:
        # Padded rows are all-zero (incl. the bias column): softmax is uniform,
        # values are 0 -> finite, and sliced off below.
        x_aug = jnp.pad(x_aug, ((0, b_pad - batch), (0, 0)))

    kernel = functools.partial(_fused_fusion_kernel, n_mod=n_mod, d_out=d_out,
                               stride=stride, slab=slab)

    out_slab = pl.pallas_call(
        kernel,
        out_shape=jax.ShapeDtypeStruct((b_pad, slab), jnp.float32),
        grid_spec=pltpu.PrefetchScalarGridSpec(
            num_scalar_prefetch=0,
            grid=(b_pad // block_b,),
            in_specs=[
                pl.BlockSpec((block_b, din_aug), lambda i: (i, 0)),
                # Constant index_map: the packed weight stays resident in VMEM
                # across grid steps (no re-DMA).
                pl.BlockSpec((din_aug, 3 * stride), lambda i: (0, 0)),
            ],
            out_specs=pl.BlockSpec((block_b, slab), lambda i: (i, 0)),
        ),
        compiler_params=pltpu.CompilerParams(
            dimension_semantics=("parallel",)),
    )(x_aug, packed["w"])

    concatenated_output = out_slab[:batch, :nd]                            # [B, N*D]
    attention_weights = out_slab[:batch, nd:nd + n_mod * n_mod].reshape(
        batch, n_mod, n_mod)                                               # [B, N, N]
    return concatenated_output, attention_weights


# ------------------------------ pure-JAX reference -------------------------

def _reference_forward(params, tensors, output_dim):
    def project(layer_params):
        return jnp.stack(
            [x @ w + b for x, (w, b) in zip(tensors, layer_params)], axis=1)

    q = project(params["query"])
    k = project(params["key"])
    v = project(params["value"])
    s = jnp.einsum("bnd,bmd->bnm", q, k) / (output_dim ** 0.5)
    w = jax.nn.softmax(s, axis=-1)
    wv = jnp.einsum("bnm,bmd->bnd", w, v)
    return wv.reshape(wv.shape[0], -1), w


if __name__ == "__main__":
    input_dims = (16, 24, 32)   # three input modalities with different dims
    output_dim = 32
    B = 20                      # exercises batch padding AND a 2-step grid

    key = jax.random.PRNGKey(0)
    key, pkey = jax.random.split(key)
    params = init_feature_fusion_params(pkey, input_dims, output_dim)
    packed = pack_feature_fusion_params(params, output_dim)

    tensors = []
    for in_dim in input_dims:
        key, xk = jax.random.split(key)
        tensors.append(jax.random.normal(xk, (B, in_dim), jnp.float32))

    out, attn = feature_fusion_forward(packed, tensors, output_dim)
    out = jax.block_until_ready(out)
    attn = jax.block_until_ready(attn)

    ref_out, ref_attn = _reference_forward(params, tensors, output_dim)
    assert out.shape == (B, len(input_dims) * output_dim)
    assert attn.shape == (B, len(input_dims), len(input_dims))
    assert jnp.allclose(out, ref_out, atol=1e-4, rtol=1e-4)
    assert jnp.allclose(attn, ref_attn, atol=1e-4, rtol=1e-4)
    # Exact softmax normalization (no approximate reciprocal anymore).
    assert jnp.allclose(attn.sum(-1), 1.0, atol=1e-5)

    print("KERNEL_OK")
</pallas_src>

<mosaic_0001>
module attributes {stable_mosaic.version = 11 : i64} {
  func.func @_fused_fusion_kernel(%arg0: i32, %arg1: memref<16x73xf32, #tpu.memory_space<vmem>>, %arg2: memref<73x384xf32, #tpu.memory_space<vmem>>, %arg3: memref<16x128xf32, #tpu.memory_space<vmem>>) attributes {dimension_semantics = [#tpu.dimension_semantics<parallel>], iteration_bounds = array<i64: 2>, scalar_prefetch = 0 : i64, scratch_operands = 0 : i64, tpu.core_type = #tpu.core_type<tc>, window_params = [{transform_indices = @transform_0, window_bounds = array<i64: 16, 73>}, {pipeline_mode = #tpu.pipeline_mode<synchronous>, transform_indices = @transform_1, window_bounds = array<i64: 73, 384>}, {transform_indices = @transform_2, window_bounds = array<i64: 16, 128>}]} {
    %c0 = arith.constant 0 : index
    %c0_0 = arith.constant 0 : index
    %0 = vector.load %arg1[%c0, %c0_0] : memref<16x73xf32, #tpu.memory_space<vmem>>, vector<16x73xf32>
    %c0_1 = arith.constant 0 : index
    %c0_2 = arith.constant 0 : index
    %1 = vector.load %arg2[%c0_1, %c0_2] : memref<73x384xf32, #tpu.memory_space<vmem>>, vector<73x384xf32>
    %cst = arith.constant dense<0.000000e+00> : vector<16x384xf32>
    %2 = tpu.matmul %0, %1, %cst {dimension_numbers = #tpu.dot_dimension_numbers<[1], [0], [0], [1], [0, 0, 1, 1], [], []>} : vector<16x73xf32>, vector<73x384xf32>, vector<16x384xf32> -> vector<16x384xf32>
    %3 = vector.extract_strided_slice %2 {offsets = [0, 0], sizes = [16, 32], strides = [1, 1]} : vector<16x384xf32> to vector<16x32xf32>
    %4 = vector.extract_strided_slice %2 {offsets = [0, 32], sizes = [16, 32], strides = [1, 1]} : vector<16x384xf32> to vector<16x32xf32>
    %5 = vector.extract_strided_slice %2 {offsets = [0, 64], sizes = [16, 32], strides = [1, 1]} : vector<16x384xf32> to vector<16x32xf32>
    %6 = vector.extract_strided_slice %2 {offsets = [0, 128], sizes = [16, 32], strides = [1, 1]} : vector<16x384xf32> to vector<16x32xf32>
    %7 = vector.extract_strided_slice %2 {offsets = [0, 160], sizes = [16, 32], strides = [1, 1]} : vector<16x384xf32> to vector<16x32xf32>
    %8 = vector.extract_strided_slice %2 {offsets = [0, 192], sizes = [16, 32], strides = [1, 1]} : vector<16x384xf32> to vector<16x32xf32>
    %9 = vector.extract_strided_slice %2 {offsets = [0, 256], sizes = [16, 32], strides = [1, 1]} : vector<16x384xf32> to vector<16x32xf32>
    %10 = vector.extract_strided_slice %2 {offsets = [0, 288], sizes = [16, 32], strides = [1, 1]} : vector<16x384xf32> to vector<16x32xf32>
    %11 = vector.extract_strided_slice %2 {offsets = [0, 320], sizes = [16, 32], strides = [1, 1]} : vector<16x384xf32> to vector<16x32xf32>
    %12 = arith.mulf %3, %6 : vector<16x32xf32>
    %cst_3 = arith.constant dense<0.000000e+00> : vector<16xf32>
    %13 = vector.multi_reduction <add>, %12, %cst_3 [1] : vector<16x32xf32> to vector<16xf32>
    %14 = vector.shape_cast %13 : vector<16xf32> to vector<16x1xf32>
    %15 = arith.mulf %3, %7 : vector<16x32xf32>
    %cst_4 = arith.constant dense<0.000000e+00> : vector<16xf32>
    %16 = vector.multi_reduction <add>, %15, %cst_4 [1] : vector<16x32xf32> to vector<16xf32>
    %17 = vector.shape_cast %16 : vector<16xf32> to vector<16x1xf32>
    %18 = arith.mulf %3, %8 : vector<16x32xf32>
    %cst_5 = arith.constant dense<0.000000e+00> : vector<16xf32>
    %19 = vector.multi_reduction <add>, %18, %cst_5 [1] : vector<16x32xf32> to vector<16xf32>
    %20 = vector.shape_cast %19 : vector<16xf32> to vector<16x1xf32>
    %21 = arith.maximumf %14, %17 : vector<16x1xf32>
    %22 = arith.maximumf %21, %20 : vector<16x1xf32>
    %23 = arith.subf %14, %22 : vector<16x1xf32>
    %24 = math.exp %23 : vector<16x1xf32>
    %25 = arith.subf %17, %22 : vector<16x1xf32>
    %26 = math.exp %25 : vector<16x1xf32>
    %27 = arith.subf %20, %22 : vector<16x1xf32>
    %28 = math.exp %27 : vector<16x1xf32>
    %29 = arith.addf %24, %26 : vector<16x1xf32>
    %30 = arith.addf %29, %28 : vector<16x1xf32>
    %cst_6 = arith.constant 1.000000e+00 : f32
    %31 = vector.broadcast %cst_6 : f32 to vector<16x1xf32>
    %32 = arith.divf %31, %30 : vector<16x1xf32>
    %33 = arith.mulf %24, %32 : vector<16x1xf32>
    %34 = arith.mulf %26, %32 : vector<16x1xf32>
    %35 = arith.mulf %28, %32 : vector<16x1xf32>
    %36 = vector.broadcast %33 : vector<16x1xf32> to vector<16x32xf32>
    %37 = arith.mulf %36, %9 : vector<16x32xf32>
    %38 = vector.broadcast %34 : vector<16x1xf32> to vector<16x32xf32>
    %39 = arith.mulf %38, %10 : vector<16x32xf32>
    %40 = arith.addf %37, %39 : vector<16x32xf32>
    %41 = vector.broadcast %35 : vector<16x1xf32> to vector<16x32xf32>
    %42 = arith.mulf %41, %11 : vector<16x32xf32>
    %43 = arith.addf %40, %42 : vector<16x32xf32>
    %44 = arith.mulf %4, %6 : vector<16x32xf32>
    %cst_7 = arith.constant dense<0.000000e+00> : vector<16xf32>
    %45 = vector.multi_reduction <add>, %44, %cst_7 [1] : vector<16x32xf32> to vector<16xf32>
    %46 = vector.shape_cast %45 : vector<16xf32> to vector<16x1xf32>
    %47 = arith.mulf %4, %7 : vector<16x32xf32>
    %cst_8 = arith.constant dense<0.000000e+00> : vector<16xf32>
    %48 = vector.multi_reduction <add>, %47, %cst_8 [1] : vector<16x32xf32> to vector<16xf32>
    %49 = vector.shape_cast %48 : vector<16xf32> to vector<16x1xf32>
    %50 = arith.mulf %4, %8 : vector<16x32xf32>
    %cst_9 = arith.constant dense<0.000000e+00> : vector<16xf32>
    %51 = vector.multi_reduction <add>, %50, %cst_9 [1] : vector<16x32xf32> to vector<16xf32>
    %52 = vector.shape_cast %51 : vector<16xf32> to vector<16x1xf32>
    %53 = arith.maximumf %46, %49 : vector<16x1xf32>
    %54 = arith.maximumf %53, %52 : vector<16x1xf32>
    %55 = arith.subf %46, %54 : vector<16x1xf32>
    %56 = math.exp %55 : vector<16x1xf32>
    %57 = arith.subf %49, %54 : vector<16x1xf32>
    %58 = math.exp %57 : vector<16x1xf32>
    %59 = arith.subf %52, %54 : vector<16x1xf32>
    %60 = math.exp %59 : vector<16x1xf32>
    %61 = arith.addf %56, %58 : vector<16x1xf32>
    %62 = arith.addf %61, %60 : vector<16x1xf32>
    %cst_10 = arith.constant 1.000000e+00 : f32
    %63 = vector.broadcast %cst_10 : f32 to vector<16x1xf32>
    %64 = arith.divf %63, %62 : vector<16x1xf32>
    %65 = arith.mulf %56, %64 : vector<16x1xf32>
    %66 = arith.mulf %58, %64 : vector<16x1xf32>
    %67 = arith.mulf %60, %64 : vector<16x1xf32>
    %68 = vector.broadcast %65 : vector<16x1xf32> to vector<16x32xf32>
    %69 = arith.mulf %68, %9 : vector<16x32xf32>
    %70 = vector.broadcast %66 : vector<16x1xf32> to vector<16x32xf32>
    %71 = arith.mulf %70, %10 : vector<16x32xf32>
    %72 = arith.addf %69, %71 : vector<16x32xf32>
    %73 = vector.broadcast %67 : vector<16x1xf32> to vector<16x32xf32>
    %74 = arith.mulf %73, %11 : vector<16x32xf32>
    %75 = arith.addf %72, %74 : vector<16x32xf32>
    %76 = arith.mulf %5, %6 : vector<16x32xf32>
    %cst_11 = arith.constant dense<0.000000e+00> : vector<16xf32>
    %77 = vector.multi_reduction <add>, %76, %cst_11 [1] : vector<16x32xf32> to vector<16xf32>
    %78 = vector.shape_cast %77 : vector<16xf32> to vector<16x1xf32>
    %79 = arith.mulf %5, %7 : vector<16x32xf32>
    %cst_12 = arith.constant dense<0.000000e+00> : vector<16xf32>
    %80 = vector.multi_reduction <add>, %79, %cst_12 [1] : vector<16x32xf32> to vector<16xf32>
    %81 = vector.shape_cast %80 : vector<16xf32> to vector<16x1xf32>
    %82 = arith.mulf %5, %8 : vector<16x32xf32>
    %cst_13 = arith.constant dense<0.000000e+00> : vector<16xf32>
    %83 = vector.multi_reduction <add>, %82, %cst_13 [1] : vector<16x32xf32> to vector<16xf32>
    %84 = vector.shape_cast %83 : vector<16xf32> to vector<16x1xf32>
    %85 = arith.maximumf %78, %81 : vector<16x1xf32>
    %86 = arith.maximumf %85, %84 : vector<16x1xf32>
    %87 = arith.subf %78, %86 : vector<16x1xf32>
    %88 = math.exp %87 : vector<16x1xf32>
    %89 = arith.subf %81, %86 : vector<16x1xf32>
    %90 = math.exp %89 : vector<16x1xf32>
    %91 = arith.subf %84, %86 : vector<16x1xf32>
    %92 = math.exp %91 : vector<16x1xf32>
    %93 = arith.addf %88, %90 : vector<16x1xf32>
    %94 = arith.addf %93, %92 : vector<16x1xf32>
    %cst_14 = arith.constant 1.000000e+00 : f32
    %95 = vector.broadcast %cst_14 : f32 to vector<16x1xf32>
    %96 = arith.divf %95, %94 : vector<16x1xf32>
    %97 = arith.mulf %88, %96 : vector<16x1xf32>
    %98 = arith.mulf %90, %96 : vector<16x1xf32>
    %99 = arith.mulf %92, %96 : vector<16x1xf32>
    %100 = vector.broadcast %97 : vector<16x1xf32> to vector<16x32xf32>
    %101 = arith.mulf %100, %9 : vector<16x32xf32>
    %102 = vector.broadcast %98 : vector<16x1xf32> to vector<16x32xf32>
    %103 = arith.mulf %102, %10 : vector<16x32xf32>
    %104 = arith.addf %101, %103 : vector<16x32xf32>
    %105 = vector.broadcast %99 : vector<16x1xf32> to vector<16x32xf32>
    %106 = arith.mulf %105, %11 : vector<16x32xf32>
    %107 = arith.addf %104, %106 : vector<16x32xf32>
    %cst_15 = arith.constant 0.000000e+00 : f32
    %108 = vector.broadcast %cst_15 : f32 to vector<16x23xf32>
    %109 = tpu.concatenate %43, %75, %107, %33, %34, %35, %65, %66, %67, %97, %98, %99, %108 in 1 : vector<16x32xf32>, vector<16x32xf32>, vector<16x32xf32>, vector<16x1xf32>, vector<16x1xf32>, vector<16x1xf32>, vector<16x1xf32>, vector<16x1xf32>, vector<16x1xf32>, vector<16x1xf32>, vector<16x1xf32>, vector<16x1xf32>, vector<16x23xf32> -> vector<16x128xf32>
    %c0_16 = arith.constant 0 : index
    %c0_17 = arith.constant 0 : index
    %110 = vector.load %arg3[%c0_16, %c0_17] : memref<16x128xf32, #tpu.memory_space<vmem>>, vector<16x128xf32>
    tpu.vector_store %arg3[%c0_16, %c0_17], %109 {strides = array<i32>} : memref<16x128xf32, #tpu.memory_space<vmem>>, vector<16x128xf32>,
    return
  }
  func.func @transform_0(%arg0: i32) -> (i32, i32) {
    %c0_i32 = arith.constant 0 : i32
    %c0_i32_0 = arith.constant 0 : i32
    return %arg0, %c0_i32 : i32, i32
  }
  func.func @transform_1(%arg0: i32) -> (i32, i32) {
    %c0_i32 = arith.constant 0 : i32
    %c0_i32_0 = arith.constant 0 : i32
    %c0_i32_1 = arith.constant 0 : i32
    return %c0_i32, %c0_i32_0 : i32, i32
  }
  func.func @transform_2(%arg0: i32) -> (i32, i32) {
    %c0_i32 = arith.constant 0 : i32
    %c0_i32_0 = arith.constant 0 : i32
    return %arg0, %c0_i32 : i32, i32
  }
}

</mosaic_0001>

<llo_original>
// kernel: tpu_custom_call.1
$region0: #{tpu_custom_call.1}
  #allocation0 [shape = 'u32[]', space=smem, size = 0x4, offset = 0x4, fixed_abs, tag = 'smem constant byte address 0x4 - core index']
  #allocation1 [shape = 'u32[144,128]{1,0:T(1,128)}', space=vmem, size = 0x12000, scoped, tag = 'internal scratch']
  %s0 = inlined_call_operand.hbm [shape: f32[32,73], index: 0, kind: input, shape index: {}]
  %s1 = inlined_call_operand.hbm [shape: f32[73,384], index: 1, kind: input, shape index: {}]
  %s2 = inlined_call_operand.hbm [shape: f32[32,128], index: 2, kind: output, shape index: {}]
  %s3 = sld [smem:[#allocation0]]
  $region49: #{tpu_custom_call.1} parent=0
    _
  %s5 = ssub.s32 1, %s3
  %s6 = scalar_select 0, %s5, %s3
  $region1: #{tpu_custom_call.1} parent=0
    #allocation2 [shape = 'u8[16384]{0}', space=vmem, size = 0x4000, scoped, tag = 'input window, operand 0']
    #allocation3 [shape = 's32[2]{0}', space=sflag, size = 0x8, scoped, tag = 'scoped memory for tpu_custom_call.1']
    #allocation4 [shape = 's32[2]{0}', space=sflag, size = 0x8, scoped, tag = 'scoped memory for tpu_custom_call.1']
    #allocation5 [shape = 'u8[122880]{0}', space=vmem, size = 0x1e000, scoped, tag = 'input window, operand 1, single buffered']
    #allocation6 [shape = 's32[1]{0}', space=sflag, size = 0x4, scoped, tag = 'scoped memory for tpu_custom_call.1']
    #allocation7 [shape = 'u8[16384]{0}', space=vmem, size = 0x4000, scoped, tag = 'output window, operand 0']
    %7 = vsyncpa [#allocation3], 0
    %s8 = scalar_lea.sflag [#allocation3], 1
    %9 = vsyncpa %s8, 0
    %10 = vsyncpa [#allocation6], 0
    %11 = vsyncpa [#allocation4], 0
    %s12 = scalar_lea.sflag [#allocation4], 1
    %13 = vsyncpa %s12, 0
    loop: start=0, step=1, limit=4
    $region2: #{tpu_custom_call.1} parent=1 // loop_pre_header
      _
    $region3: #{tpu_custom_call.1} parent=1 // loop_header
      %s15 = sphi 0, %s19
      %p16 = scmp.ge.s32.totalorder %s15, 4
      %s25 = sphi 0, %s27
      %s28 = sphi 0, %s25
      %s29 = sphi 0, %s28
      %s45 = sphi 0, %s29
      %s49 = sphi 0, %s49
      %s51 = sphi 0, %s49
      %s52 = sphi 0, %s51
      %s66 = sphi 0, %s52
      %s72 = sphi 0, %s74
      %s75 = sphi 0, %s72
      %s76 = sphi 0, %s75
      %s92 = sphi 0, %s76
    $region4: #{tpu_custom_call.1} parent=1 // loop_header_branch
      %18 = sbr.rel (%p16) target = $region8
    $region5: #{tpu_custom_call.1} parent=1 // loop_body
      %s20 = ssub.s32 %s15, 1
      %s21 = ssub.s32 %s15, 2
      %s22 = sadd.s32 %s15, 1
      %s23 = ssub.s32 %s15, %s22
      %p24 = scmp.eq.s32.totalorder %s23, 0
      %s26 = sadd.s32 %s25, 1
      %s27 = scalar_select %p24, %s25, %s26
      %p30 = pneg %p24
      %p31 = scmp.eq.s32.totalorder %s15, 1
      %p32 = por %p30, %p31
      %p33 = scmp.ne.s32.totalorder %s25, %s28
      %p34 = scmp.eq.s32.totalorder %s15, 0
      %p35 = por %p33, %p34
      %p36 = scmp.ne.s32.totalorder %s25, %s28
      %p37 = scmp.eq.s32.totalorder %s20, 1
      %p38 = por %p36, %p37
      %p39 = scmp.ne.s32.totalorder %s28, %s29
      %p40 = scmp.eq.s32.totalorder %s20, 0
      %p41 = por %p39, %p40
      %p42 = scmp.ne.s32.totalorder %s28, %s29
      %p43 = scmp.eq.s32.totalorder %s21, 1
      %p44 = por %p42, %p43
      %p46 = scmp.ne.s32.totalorder %s29, %s45
      %p47 = scmp.eq.s32.totalorder %s21, 0
      %p48 = por %p46, %p47
      %s50 = sadd.s32 %s49, 1
      %p53 = scmp.eq.s32.totalorder %s15, 1
      %p54 = scmp.ne.s32.totalorder %s49, %s51
      %p55 = scmp.eq.s32.totalorder %s15, 0
      %p56 = por %p54, %p55
      %p57 = scmp.ne.s32.totalorder %s49, %s51
      %p58 = scmp.eq.s32.totalorder %s20, 1
      %p59 = por %p57, %p58
      %p60 = scmp.ne.s32.totalorder %s51, %s52
      %p61 = scmp.eq.s32.totalorder %s20, 0
      %p62 = por %p60, %p61
      %p63 = scmp.ne.s32.totalorder %s51, %s52
      %p64 = scmp.eq.s32.totalorder %s21, 1
      %p65 = por %p63, %p64
      %p67 = scmp.ne.s32.totalorder %s52, %s66
      %p68 = scmp.eq.s32.totalorder %s21, 0
      %p69 = por %p67, %p68
      %s70 = ssub.s32 %s15, %s22
      %p71 = scmp.eq.s32.totalorder %s70, 0
      %s73 = sadd.s32 %s72, 1
      %s74 = scalar_select %p71, %s72, %s73
      %p77 = pneg %p71
      %p78 = scmp.eq.s32.totalorder %s15, 1
      %p79 = por %p77, %p78
      %p80 = scmp.ne.s32.totalorder %s72, %s75
      %p81 = scmp.eq.s32.totalorder %s15, 0
      %p82 = por %p80, %p81
      %p83 = scmp.ne.s32.totalorder %s72, %s75
      %p84 = scmp.eq.s32.totalorder %s20, 1
      %p85 = por %p83, %p84
      %p86 = scmp.ne.s32.totalorder %s75, %s76
      %p87 = scmp.eq.s32.totalorder %s20, 0
      %p88 = por %p86, %p87
      %p89 = scmp.ne.s32.totalorder %s75, %s76
      %p90 = scmp.eq.s32.totalorder %s21, 1
      %p91 = por %p89, %p90
      %p93 = scmp.ne.s32.totalorder %s76, %s92
      %p94 = scmp.eq.s32.totalorder %s21, 0
      %p95 = por %p93, %p94
      %p96 = scmp.le.s32.totalorder 1, %s15
      %p97 = scmp.lt.s32.totalorder %s15, 3
      %p98 = pnand %p96, %p97
      %p99 = pneg %p98
      // Predicated region
      $region9: #{tpu_custom_call.1} parent=5 // pred_check
        _
      $region10: #{tpu_custom_call.1} parent=5 // pred_check_branch
        %101 = sbr.rel (%p98) target = $region12
      $region11: #{tpu_custom_call.1} parent=5 // pred_region
        %s102 = ssub.s32 %s15, 1
        // Predicated region
        $region13: #{tpu_custom_call.1} parent=11 // pred_check
          %p103 = pneg %p62
        $region14: #{tpu_custom_call.1} parent=11 // pred_check_branch
          %105 = sbr.rel (%p103) target = $region16
        $region15: #{tpu_custom_call.1} parent=11 // pred_region
          %s107 = ssub.s32 3840, 3840
          %108 = vsyncadd [#allocation6], %s107
          %s109 = sshll.u32 [#allocation5], 4
          %s110 = int_to_ptr.vmem [resolvable:$true] %s109
          %115 = dma.hbm_to_vmem [thread:$0]  %s1, 3840, %s110, [#allocation6], 384, 384, 24
        $region16: #{tpu_custom_call.1} parent=11 // pred_fallthru
          _
      $region12: #{tpu_custom_call.1} parent=5 // pred_fallthru
        _
      %p116 = scmp.lt.s32.totalorder %s15, 2
      // Predicated region
      $region17: #{tpu_custom_call.1} parent=5 // pred_check
        %p117 = pneg %p116
      $region18: #{tpu_custom_call.1} parent=5 // pred_check_branch
        %119 = sbr.rel (%p117) target = $region20
      $region19: #{tpu_custom_call.1} parent=5 // pred_region
        // Predicated region
        $region21: #{tpu_custom_call.1} parent=19 // pred_check
          %p120 = pneg %p35
        $region22: #{tpu_custom_call.1} parent=19 // pred_check_branch
          %122 = sbr.rel (%p120) target = $region24
        $region23: #{tpu_custom_call.1} parent=19 // pred_region
          %s123 = sand.u32 %s25, 1
          %s124 = scalar_lea.sflag [#allocation3], %s123
          %s125 = sand.u32 %s25, 1
          %s126 = smul.addr %s125, 16
          %s127 = scalar_lea.vmem [#allocation2], %s126
          %s128 = smul.u32 2, %s15
          %s130 = ssub.s32 256, 256
          %131 = vsyncadd %s124, %s130
          %s132 = smul.addr %s128, 128
          %s133 = scalar_lea.hbm %s0, %s132
          %s134 = sshll.u32 %s127, 4
          %s135 = int_to_ptr.vmem [resolvable:$true] %s134
          %140 = dma.hbm_to_vmem [thread:$0]  %s133, 256, %s135, %s124, 128, 128, 8
        $region24: #{tpu_custom_call.1} parent=19 // pred_fallthru
          _
      $region20: #{tpu_custom_call.1} parent=5 // pred_fallthru
        _
      %p141 = scmp.le.s32.totalorder 1, %s15
      %p142 = scmp.lt.s32.totalorder %s15, 3
      %p143 = pnand %p141, %p142
      %p144 = pneg %p143
      // Predicated region
      $region25: #{tpu_custom_call.1} parent=5 // pred_check
        _
      $region26: #{tpu_custom_call.1} parent=5 // pred_check_branch
        %146 = sbr.rel (%p143) target = $region28
      $region27: #{tpu_custom_call.1} parent=5 // pred_region
        %s147 = ssub.s32 %s15, 1
        %s148 = sand.u32 %s28, 1
        %s149 = scalar_lea.sflag [#allocation3], %s148
        %s150 = sand.u32 %s28, 1
        %s151 = smul.addr %s150, 16
        %s152 = scalar_lea.vmem [#allocation2], %s151
        // Predicated region
        $region29: #{tpu_custom_call.1} parent=27 // pred_check
          %p153 = pneg %p41
        $region30: #{tpu_custom_call.1} parent=27 // pred_check_branch
          %155 = sbr.rel (%p153) target = $region32
        $region31: #{tpu_custom_call.1} parent=27 // pred_region
          %156 = dma.done %s149, 256
        $region32: #{tpu_custom_call.1} parent=27 // pred_fallthru
          _
        // Predicated region
        $region33: #{tpu_custom_call.1} parent=27 // pred_check
          %p157 = pneg %p62
        $region34: #{tpu_custom_call.1} parent=27 // pred_check_branch
          %159 = sbr.rel (%p157) target = $region36
        $region35: #{tpu_custom_call.1} parent=27 // pred_region
          %160 = dma.done [#allocation6], 3840
        $region36: #{tpu_custom_call.1} parent=27 // pred_fallthru
          _
        %s161 = sand.u32 %s28, 1
        %s162 = scalar_lea.sflag [#allocation3], %s161
        %s163 = sand.u32 %s28, 1
        %s164 = smul.addr %s163, 16
        %s165 = scalar_lea.vmem [#allocation2], %s164
        %p166 = pneg %p41
        %p167 = pneg %p38
        %p168 = pneg %p62
        %p169 = pneg %p59
        %p170 = pneg %p88
        %p171 = pneg %p85
        %s172 = sand.u32 %s75, 1
        %s173 = scalar_lea.sflag [#allocation4], %s172
        %s174 = sand.u32 %s75, 1
        %s175 = smul.addr %s174, 16
        %s176 = scalar_lea.vmem [#allocation7], %s175
        %s177 = smul.u32 2, %s20
        %s178 = smul.u32 2, %s20
        %v179 = vld [vmem:[%s152] sm:$0xff]
        %v180 = vld [vmem:[%s152 + $0x8] sm:$0xff]
        %v181 = vld [vmem:[#allocation5] sm:$0xff]
        %v182 = vld [vmem:[#allocation5 + $0x8] sm:$0xff]
        %v183 = vld [vmem:[#allocation5 + $0x10] sm:$0xff]
        %v184 = vld [vmem:[#allocation5 + $0x18] sm:$0xff]
        %v185 = vld [vmem:[#allocation5 + $0x20] sm:$0xff]
        %v186 = vld [vmem:[#allocation5 + $0x28] sm:$0xff]
        %v187 = vld [vmem:[#allocation5 + $0x30] sm:$0xff]
        %v188 = vld [vmem:[#allocation5 + $0x38] sm:$0xff]
        %v189 = vld [vmem:[#allocation5 + $0x40] sm:$0xff]
        %v190 = vld [vmem:[#allocation5 + $0x48] sm:$0xff]
        %v191 = vld [vmem:[#allocation5 + $0x50] sm:$0xff]
        %v192 = vld [vmem:[#allocation5 + $0x58] sm:$0xff]
        %v193 = vld [vmem:[#allocation5 + $0x60] sm:$0xff]
        %v194 = vld [vmem:[#allocation5 + $0x68] sm:$0xff]
        %v195 = vld [vmem:[#allocation5 + $0x70] sm:$0xff]
        %v196 = vld [vmem:[#allocation5 + $0x78] sm:$0xff]
        %v197 = vld [vmem:[#allocation5 + $0x80] sm:$0xff]
        %v198 = vld [vmem:[#allocation5 + $0x88] sm:$0xff]
        %v199 = vld [vmem:[#allocation5 + $0x90] sm:$0xff]
        %v200 = vld [vmem:[#allocation5 + $0x98] sm:$0xff]
        %v201 = vld [vmem:[#allocation5 + $0xa0] sm:$0xff]
        %v202 = vld [vmem:[#allocation5 + $0xa8] sm:$0xff]
        %v203 = vld [vmem:[#allocation5 + $0xb0] sm:$0xff]
        %v204 = vld [vmem:[#allocation5 + $0xb8] sm:$0xff]
        %v205 = vld [vmem:[#allocation5 + $0xc0] sm:$0xff]
        %v206 = vld [vmem:[#allocation5 + $0xc8] sm:$0xff]
        %v207 = vld [vmem:[#allocation5 + $0xd0] sm:$0xff]
        %v208 = vld [vmem:[#allocation5 + $0xd8] sm:$0x1]
        %v209 = vld [vmem:[#allocation5 + $0xe0] sm:$0x1]
        %v210 = vld [vmem:[#allocation5 + $0xe8] sm:$0x1]
        %vm211 = vcmask 596992
        %v213 = vsel %vm211, %v179, 0
        %v216 = vsel %vm211, %v180, 0
        %vm218 = vcmask 1040384
        %v220 = vsel %vm218, %v208, 0
        %v223 = vsel %vm218, %v209, 0
        %v226 = vsel %vm218, %v210, 0
        %228 = vmatprep.subr.mxu0 %v182
        %229 = vmatpush1.msra.mxu0 %v181
        %230 = vmatprep.subr.mxu0 %v185
        %231 = vmatpush1.msra.mxu0 %v184
        %232 = vmatprep.subr.mxu0 %v188
        %233 = vmatpush1.msra.mxu0 %v187
        %234 = vmatprep.subr.mxu0 %v191
        %235 = vmatpush1.msra.mxu0 %v190
        %236 = vmatprep.subr.mxu0 %v194
        %237 = vmatpush1.msra.mxu0 %v193
        %238 = vmatprep.subr.mxu0 %v197
        %239 = vmatpush1.msra.mxu0 %v196
        %240 = vmatprep.subr.mxu0 %v200
        %241 = vmatpush1.msra.mxu0 %v199
        %242 = vmatprep.subr.mxu0 %v203
        %243 = vmatpush1.msra.mxu0 %v202
        %244 = vmatprep.subr.mxu0 %v206
        %245 = vmatpush1.msra.mxu0 %v205
        %246 = vmatprep.subr.mxu0 %v223
        %247 = vmatpush1.msra.mxu0 %v220
        %248 = vmatprep.subr.mxu0 0.0
        %249 = vmatpush1.msra.mxu0 0.0
        %250 = vmatprep.subr.mxu0 0.0
        %251 = vmatpush1.msra.mxu0 0.0
        %252 = vmatprep.subr.mxu0 0.0
        %253 = vmatpush1.msra.mxu0 0.0
        %254 = vmatprep.subr.mxu0 0.0
        %255 = vmatpush1.msra.mxu0 0.0
        %256 = vmatprep.subr.mxu0 0.0
        %257 = vmatpush1.msra.mxu0 0.0
        %258 = vmatprep.subr.mxu0 0.0
        %259 = vmatpush1.msra.mxu0 0.0
        %260 = vmatprep.subr.mxu0 0.0
        %261 = vmatpush1.msra.mxu0 0.0
        %262 = vmatprep.subr.mxu0 0.0
        %263 = vmatpush1.msra.mxu0 0.0
        %264 = vmatprep.subr.mxu0 0.0
        %265 = vmatpush1.msra.mxu0 0.0
        %266 = vmatprep.subr.mxu0 0.0
        %267 = vmatpush1.msra.mxu0 0.0
        %268 = vmatprep.subr.mxu0 0.0
        %269 = vmatpush1.msra.mxu0 0.0
        %270 = vmatprep.subr.mxu0 0.0
        %271 = vmatpush1.msra.mxu0 0.0
        %272 = vmatprep.subr.mxu0 0.0
        %273 = vmatpush1.msra.mxu0 0.0
        %274 = vmatprep.subr.mxu0 0.0
        %275 = vmatpush1.msra.mxu0 0.0
        %276 = vmatprep.subr.mxu0 0.0
        %277 = vmatpush1.msra.mxu0 0.0
        %278 = vmatprep.subr.mxu0 0.0
        %279 = vmatpush1.msra.mxu0 0.0
        %280 = vmatprep.subr.mxu0 0.0
        %281 = vmatpush1.msra.mxu0 0.0
        %282 = vmatprep.subr.mxu0 0.0
        %283 = vmatpush1.msra.mxu0 0.0
        %284 = vmatprep.subr.mxu0 0.0
        %285 = vmatpush1.msra.mxu0 0.0
        %286 = vmatprep.subr.mxu0 0.0
        %287 = vmatpush1.msra.mxu0 0.0
        %288 = vmatprep.subr.mxu0 0.0
        %289 = vmatpush1.msra.mxu0 0.0
        %290 = vmatprep.subr.mxu0 0.0
        %291 = vmatpush1.msra.mxu0 0.0
        %292 = vmatprep.mubr.f32.mxu0 0.0
        %293 = vmatmul.mubr.f32.gmra.mrb[0].mxu0 %v213
        %v294 = vpop.f32.mrb[0].mxu0
        %v295 = vadd.f32 0.0, %v294
        %v296 = vpop.f32.mrb[0].mxu0
        %v297 = vadd.f32 0.0, %v296
        %298 = vmatprep.mubr.f32.mxu0 0.0
        %299 = vmatmul.mubr.f32.gmra.mrb[0].mxu0 %v216
        %v300 = vpop.f32.mrb[0].mxu0
        %v301 = vadd.f32 0.0, %v300
        %v302 = vpop.f32.mrb[0].mxu0
        %v303 = vadd.f32 0.0, %v302
        %304 = vdwg.mxu0
        %305 = vmatprep.subr.mxu0 0.0
        %306 = vmatpush1.msra.mxu0 %v183
        %307 = vmatprep.subr.mxu0 0.0
        %308 = vmatpush1.msra.mxu0 %v186
        %309 = vmatprep.subr.mxu0 0.0
        %310 = vmatpush1.msra.mxu0 %v189
        %311 = vmatprep.subr.mxu0 0.0
        %312 = vmatpush1.msra.mxu0 %v192
        %313 = vmatprep.subr.mxu0 0.0
        %314 = vmatpush1.msra.mxu0 %v195
        %315 = vmatprep.subr.mxu0 0.0
        %316 = vmatpush1.msra.mxu0 %v198
        %317 = vmatprep.subr.mxu0 0.0
        %318 = vmatpush1.msra.mxu0 %v201
        %319 = vmatprep.subr.mxu0 0.0
        %320 = vmatpush1.msra.mxu0 %v204
        %321 = vmatprep.subr.mxu0 0.0
        %322 = vmatpush1.msra.mxu0 %v207
        %323 = vmatprep.subr.mxu0 0.0
        %324 = vmatpush1.msra.mxu0 %v226
        %325 = vmatprep.subr.mxu0 0.0
        %326 = vmatpush1.msra.mxu0 0.0
        %327 = vmatprep.subr.mxu0 0.0
        %328 = vmatpush1.msra.mxu0 0.0
        %329 = vmatprep.subr.mxu0 0.0
        %330 = vmatpush1.msra.mxu0 0.0
        %331 = vmatprep.subr.mxu0 0.0
        %332 = vmatpush1.msra.mxu0 0.0
        %333 = vmatprep.subr.mxu0 0.0
        %334 = vmatpush1.msra.mxu0 0.0
        %335 = vmatprep.subr.mxu0 0.0
        %336 = vmatpush1.msra.mxu0 0.0
        %337 = vmatprep.subr.mxu0 0.0
        %338 = vmatpush1.msra.mxu0 0.0
        %339 = vmatprep.subr.mxu0 0.0
        %340 = vmatpush1.msra.mxu0 0.0
        %341 = vmatprep.subr.mxu0 0.0
        %342 = vmatpush1.msra.mxu0 0.0
        %343 = vmatprep.subr.mxu0 0.0
        %344 = vmatpush1.msra.mxu0 0.0
        %345 = vmatprep.subr.mxu0 0.0
        %346 = vmatpush1.msra.mxu0 0.0
        %347 = vmatprep.subr.mxu0 0.0
        %348 = vmatpush1.msra.mxu0 0.0
        %349 = vmatprep.subr.mxu0 0.0
        %350 = vmatpush1.msra.mxu0 0.0
        %351 = vmatprep.subr.mxu0 0.0
        %352 = vmatpush1.msra.mxu0 0.0
        %353 = vmatprep.subr.mxu0 0.0
        %354 = vmatpush1.msra.mxu0 0.0
        %355 = vmatprep.subr.mxu0 0.0
        %356 = vmatpush1.msra.mxu0 0.0
        %357 = vmatprep.subr.mxu0 0.0
        %358 = vmatpush1.msra.mxu0 0.0
        %359 = vmatprep.subr.mxu0 0.0
        %360 = vmatpush1.msra.mxu0 0.0
        %361 = vmatprep.subr.mxu0 0.0
        %362 = vmatpush1.msra.mxu0 0.0
        %363 = vmatprep.subr.mxu0 0.0
        %364 = vmatpush1.msra.mxu0 0.0
        %365 = vmatprep.subr.mxu0 0.0
        %366 = vmatpush1.msra.mxu0 0.0
        %367 = vmatprep.subr.mxu0 0.0
        %368 = vmatpush1.msra.mxu0 0.0
        %369 = vmatprep.mubr.f32.mxu0 0.0
        %370 = vmatmul.mubr.f32.gmra.mrb[0].mxu0 %v213
        %v371 = vpop.f32.mrb[0].mxu0
        %v372 = vadd.f32 0.0, %v371
        %v373 = vpop.f32.mrb[0].mxu0
        %374 = vmatprep.mubr.f32.mxu0 0.0
        %375 = vmatmul.mubr.f32.gmra.mrb[0].mxu0 %v216
        %v376 = vpop.f32.mrb[0].mxu0
        %v377 = vadd.f32 0.0, %v376
        %v378 = vpop.f32.mrb[0].mxu0
        %379 = vdwg.mxu0
        %v380 = vmul.f32 %v295, %v297
        %v381 = vmul.f32 %v301, %v303
        %vm382 = vcmask 261120
        %v383 = vsel %vm382, %v380, 0.0
        %384 = vadd.xlane.f32.xlu0 %v383
        %v385 = vpop.xlane.xlu0 %384
        %v386 = vsel %vm382, %v381, 0.0
        %387 = vadd.xlane.f32.xlu0 %v386
        %v388 = vpop.xlane.xlu0 %387
        %391 = vrot.lane.b32.xlu0 %v297, 96
        %v392 = vpop.permute.xlu0 %391
        %393 = vrot.lane.b32.xlu0 %v303, 96
        %v394 = vpop.permute.xlu0 %393
        %v397 = vmul.f32 %v295, %v392
        %v398 = vmul.f32 %v301, %v394
        %v399 = vsel %vm382, %v397, 0.0
        %400 = vadd.xlane.f32.xlu0 %v399
        %v401 = vpop.xlane.xlu0 %400
        %v402 = vsel %vm382, %v398, 0.0
        %403 = vadd.xlane.f32.xlu0 %v402
        %v404 = vpop.xlane.xlu0 %403
        %405 = vrot.lane.b32.xlu0 %v297, 64
        %v406 = vpop.permute.xlu0 %405
        %407 = vrot.lane.b32.xlu0 %v303, 64
        %v408 = vpop.permute.xlu0 %407
        %v411 = vmul.f32 %v295, %v406
        %v412 = vmul.f32 %v301, %v408
        %v413 = vsel %vm382, %v411, 0.0
        %414 = vadd.xlane.f32.xlu0 %v413
        %v415 = vpop.xlane.xlu0 %414
        %v416 = vsel %vm382, %v412, 0.0
        %417 = vadd.xlane.f32.xlu0 %v416
        %v418 = vpop.xlane.xlu0 %417
        %v419 = vmax.f32 %v385, %v401
        %v420 = vmax.f32 %v388, %v404
        %v421 = vmax.f32 %v419, %v415
        %v422 = vmax.f32 %v420, %v418
        %v423 = vsub.f32 %v385, %v421
        %v424 = vsub.f32 %v388, %v422
        %v425 = vmul.f32 %v423, 1.442695
        %v426 = vpow.pop %v425
        %v427 = vmul.f32 %v424, 1.442695
        %v428 = vpow.pop %v427
        %v429 = vsub.f32 %v401, %v421
        %v430 = vsub.f32 %v404, %v422
        %v431 = vmul.f32 %v429, 1.442695
        %v432 = vpow.pop %v431
        %v433 = vmul.f32 %v430, 1.442695
        %v434 = vpow.pop %v433
        %v435 = vsub.f32 %v415, %v421
        %v436 = vsub.f32 %v418, %v422
        %v437 = vmul.f32 %v435, 1.442695
        %v438 = vpow.pop %v437
        %v439 = vmul.f32 %v436, 1.442695
        %v440 = vpow.pop %v439
        %v441 = vadd.f32 %v426, %v432
        %v442 = vadd.f32 %v428, %v434
        %v443 = vadd.f32 %v441, %v438
        %v444 = vadd.f32 %v442, %v440
        %v445 = vrcp.pop %v443
        %v446 = vmul.f32 1.0, %v445
        %v447 = vrcp.pop %v444
        %v448 = vmul.f32 1.0, %v447
        %v449 = vmul.f32 %v426, %v446
        %v450 = vmul.f32 %v428, %v448
        %v451 = vmul.f32 %v432, %v446
        %v452 = vmul.f32 %v434, %v448
        %v453 = vmul.f32 %v438, %v446
        %v454 = vmul.f32 %v440, %v448
        %v455 = vmul.f32 %v449, %v372
        %v456 = vmul.f32 %v450, %v377
        %v457 = vmul.f32 %v451, %v372
        %v458 = vmul.f32 %v452, %v377
        %461 = vrot.lane.b32.xlu0 %v457, 96
        %v462 = vpop.permute.xlu0 %461
        %463 = vrot.lane.b32.xlu0 %v458, 96
        %v464 = vpop.permute.xlu0 %463
        %v467 = vadd.f32 %v455, %v462
        %v468 = vadd.f32 %v456, %v464
        %v469 = vmul.f32 %v453, %v372
        %v470 = vmul.f32 %v454, %v377
        %473 = vrot.lane.b32.xlu0 %v469, 64
        %v474 = vpop.permute.xlu0 %473
        %475 = vrot.lane.b32.xlu0 %v470, 64
        %v476 = vpop.permute.xlu0 %475
        %v479 = vadd.f32 %v467, %v474
        %v480 = vadd.f32 %v468, %v476
        %481 = vrot.lane.b32.xlu0 %v297, 32
        %v482 = vpop.permute.xlu0 %481
        %483 = vrot.lane.b32.xlu0 %v303, 32
        %v484 = vpop.permute.xlu0 %483
        %v487 = vmul.f32 %v295, %v482
        %v488 = vmul.f32 %v301, %v484
        %491 = vrot.lane.b32.xlu0 %v487, 96
        %v492 = vpop.permute.xlu0 %491
        %493 = vrot.lane.b32.xlu0 %v488, 96
        %v494 = vpop.permute.xlu0 %493
        %v497 = vsel %vm382, %v492, 0.0
        %498 = vadd.xlane.f32.xlu0 %v497
        %v499 = vpop.xlane.xlu0 %498
        %v500 = vsel %vm382, %v494, 0.0
        %501 = vadd.xlane.f32.xlu0 %v500
        %v502 = vpop.xlane.xlu0 %501
        %505 = vrot.lane.b32.xlu0 %v380, 96
        %v506 = vpop.permute.xlu0 %505
        %507 = vrot.lane.b32.xlu0 %v381, 96
        %v508 = vpop.permute.xlu0 %507
        %v511 = vsel %vm382, %v506, 0.0
        %512 = vadd.xlane.f32.xlu0 %v511
        %v513 = vpop.xlane.xlu0 %512
        %v514 = vsel %vm382, %v508, 0.0
        %515 = vadd.xlane.f32.xlu0 %v514
        %v516 = vpop.xlane.xlu0 %515
        %519 = vrot.lane.b32.xlu0 %v397, 96
        %v520 = vpop.permute.xlu0 %519
        %521 = vrot.lane.b32.xlu0 %v398, 96
        %v522 = vpop.permute.xlu0 %521
        %v525 = vsel %vm382, %v520, 0.0
        %526 = vadd.xlane.f32.xlu0 %v525
        %v527 = vpop.xlane.xlu0 %526
        %v528 = vsel %vm382, %v522, 0.0
        %529 = vadd.xlane.f32.xlu0 %v528
        %v530 = vpop.xlane.xlu0 %529
        %v531 = vmax.f32 %v499, %v513
        %v532 = vmax.f32 %v502, %v516
        %v533 = vmax.f32 %v531, %v527
        %v534 = vmax.f32 %v532, %v530
        %v535 = vsub.f32 %v499, %v533
        %v536 = vsub.f32 %v502, %v534
        %v537 = vmul.f32 %v535, 1.442695
        %v538 = vpow.pop %v537
        %v539 = vmul.f32 %v536, 1.442695
        %v540 = vpow.pop %v539
        %v541 = vsub.f32 %v513, %v533
        %v542 = vsub.f32 %v516, %v534
        %v543 = vmul.f32 %v541, 1.442695
        %v544 = vpow.pop %v543
        %v545 = vmul.f32 %v542, 1.442695
        %v546 = vpow.pop %v545
        %v547 = vsub.f32 %v527, %v533
        %v548 = vsub.f32 %v530, %v534
        %v549 = vmul.f32 %v547, 1.442695
        %v550 = vpow.pop %v549
        %v551 = vmul.f32 %v548, 1.442695
        %v552 = vpow.pop %v551
        %v553 = vadd.f32 %v538, %v544
        %v554 = vadd.f32 %v540, %v546
        %v555 = vadd.f32 %v553, %v550
        %v556 = vadd.f32 %v554, %v552
        %v557 = vrcp.pop %v555
        %v558 = vmul.f32 1.0, %v557
        %v559 = vrcp.pop %v556
        %v560 = vmul.f32 1.0, %v559
        %v561 = vmul.f32 %v538, %v558
        %v562 = vmul.f32 %v540, %v560
        %v563 = vmul.f32 %v544, %v558
        %v564 = vmul.f32 %v546, %v560
        %v565 = vmul.f32 %v550, %v558
        %v566 = vmul.f32 %v552, %v560
        %v567 = vmul.f32 %v561, %v372
        %v568 = vmul.f32 %v562, %v377
        %v569 = vmul.f32 %v563, %v372
        %v570 = vmul.f32 %v564, %v377
        %573 = vrot.lane.b32.xlu0 %v569, 96
        %v574 = vpop.permute.xlu0 %573
        %575 = vrot.lane.b32.xlu0 %v570, 96
        %v576 = vpop.permute.xlu0 %575
        %v579 = vadd.f32 %v567, %v574
        %v580 = vadd.f32 %v568, %v576
        %v581 = vmul.f32 %v565, %v372
        %v582 = vmul.f32 %v566, %v377
        %585 = vrot.lane.b32.xlu0 %v581, 64
        %v586 = vpop.permute.xlu0 %585
        %587 = vrot.lane.b32.xlu0 %v582, 64
        %v588 = vpop.permute.xlu0 %587
        %v591 = vadd.f32 %v579, %v586
        %v592 = vadd.f32 %v580, %v588
        %595 = vrot.lane.b32.xlu0 %v411, 64
        %v596 = vpop.permute.xlu0 %595
        %597 = vrot.lane.b32.xlu0 %v412, 64
        %v598 = vpop.permute.xlu0 %597
        %v601 = vsel %vm382, %v596, 0.0
        %602 = vadd.xlane.f32.xlu0 %v601
        %v603 = vpop.xlane.xlu0 %602
        %v604 = vsel %vm382, %v598, 0.0
        %605 = vadd.xlane.f32.xlu0 %v604
        %v606 = vpop.xlane.xlu0 %605
        %607 = vrot.lane.b32.xlu0 %v487, 64
        %v608 = vpop.permute.xlu0 %607
        %609 = vrot.lane.b32.xlu0 %v488, 64
        %v610 = vpop.permute.xlu0 %609
        %v613 = vsel %vm382, %v608, 0.0
        %614 = vadd.xlane.f32.xlu0 %v613
        %v615 = vpop.xlane.xlu0 %614
        %v616 = vsel %vm382, %v610, 0.0
        %617 = vadd.xlane.f32.xlu0 %v616
        %v618 = vpop.xlane.xlu0 %617
        %619 = vrot.lane.b32.xlu0 %v380, 64
        %v620 = vpop.permute.xlu0 %619
        %621 = vrot.lane.b32.xlu0 %v381, 64
        %v622 = vpop.permute.xlu0 %621
        %v625 = vsel %vm382, %v620, 0.0
        %626 = vadd.xlane.f32.xlu0 %v625
        %v627 = vpop.xlane.xlu0 %626
        %v628 = vsel %vm382, %v622, 0.0
        %629 = vadd.xlane.f32.xlu0 %v628
        %v630 = vpop.xlane.xlu0 %629
        %v631 = vmax.f32 %v603, %v615
        %v632 = vmax.f32 %v606, %v618
        %v633 = vmax.f32 %v631, %v627
        %v634 = vmax.f32 %v632, %v630
        %v635 = vsub.f32 %v603, %v633
        %v636 = vsub.f32 %v606, %v634
        %v637 = vmul.f32 %v635, 1.442695
        %v638 = vpow.pop %v637
        %v639 = vmul.f32 %v636, 1.442695
        %v640 = vpow.pop %v639
        %v641 = vsub.f32 %v615, %v633
        %v642 = vsub.f32 %v618, %v634
        %v643 = vmul.f32 %v641, 1.442695
        %v644 = vpow.pop %v643
        %v645 = vmul.f32 %v642, 1.442695
        %v646 = vpow.pop %v645
        %v647 = vsub.f32 %v627, %v633
        %v648 = vsub.f32 %v630, %v634
        %v649 = vmul.f32 %v647, 1.442695
        %v650 = vpow.pop %v649
        %v651 = vmul.f32 %v648, 1.442695
        %v652 = vpow.pop %v651
        %v653 = vadd.f32 %v638, %v644
        %v654 = vadd.f32 %v640, %v646
        %v655 = vadd.f32 %v653, %v650
        %v656 = vadd.f32 %v654, %v652
        %v657 = vrcp.pop %v655
        %v658 = vmul.f32 1.0, %v657
        %v659 = vrcp.pop %v656
        %v660 = vmul.f32 1.0, %v659
        %v661 = vmul.f32 %v638, %v658
        %v662 = vmul.f32 %v640, %v660
        %v663 = vmul.f32 %v644, %v658
        %v664 = vmul.f32 %v646, %v660
        %v665 = vmul.f32 %v650, %v658
        %v666 = vmul.f32 %v652, %v660
        %v667 = vmul.f32 %v661, %v372
        %v668 = vmul.f32 %v662, %v377
        %v669 = vmul.f32 %v663, %v372
        %v670 = vmul.f32 %v664, %v377
        %673 = vrot.lane.b32.xlu0 %v669, 96
        %v674 = vpop.permute.xlu0 %673
        %675 = vrot.lane.b32.xlu0 %v670, 96
        %v676 = vpop.permute.xlu0 %675
        %v679 = vadd.f32 %v667, %v674
        %v680 = vadd.f32 %v668, %v676
        %v681 = vmul.f32 %v665, %v372
        %v682 = vmul.f32 %v666, %v377
        %685 = vrot.lane.b32.xlu0 %v681, 64
        %v686 = vpop.permute.xlu0 %685
        %687 = vrot.lane.b32.xlu0 %v682, 64
        %v688 = vpop.permute.xlu0 %687
        %v691 = vadd.f32 %v679, %v686
        %v692 = vadd.f32 %v680, %v688
        %695 = vrot.lane.b32.xlu0 %v591, 32
        %v696 = vpop.permute.xlu0 %695
        %697 = vrot.lane.b32.xlu0 %v592, 32
        %v698 = vpop.permute.xlu0 %697
        %703 = vrot.lane.b32.xlu0 %v691, 64
        %v704 = vpop.permute.xlu0 %703
        %705 = vrot.lane.b32.xlu0 %v692, 64
        %v706 = vpop.permute.xlu0 %705
        %v709 = vsel %vm382, %v479, %v696
        %v710 = vsel %vm382, %v480, %v698
        %vm711 = vcmask 523264
        %v712 = vsel %vm711, %v709, %v704
        %v713 = vsel %vm711, %v710, %v706
        %vm714 = vcmask 785408
        %v715 = vsel %vm714, %v712, %v449
        %v716 = vsel %vm714, %v713, %v450
        %vm717 = vcmask 793600
        %v718 = vsel %vm717, %v715, %v451
        %v719 = vsel %vm717, %v716, %v452
        %vm720 = vcmask 801792
        %v721 = vsel %vm720, %v718, %v453
        %v722 = vsel %vm720, %v719, %v454
        %vm723 = vcmask 809984
        %v724 = vsel %vm723, %v721, %v561
        %v725 = vsel %vm723, %v722, %v562
        %vm726 = vcmask 818176
        %v727 = vsel %vm726, %v724, %v563
        %v728 = vsel %vm726, %v725, %v564
        %vm729 = vcmask 826368
        %v730 = vsel %vm729, %v727, %v565
        %v731 = vsel %vm729, %v728, %v566
        %vm732 = vcmask 834560
        %v733 = vsel %vm732, %v730, %v661
        %v734 = vsel %vm732, %v731, %v662
        %vm735 = vcmask 842752
        %v736 = vsel %vm735, %v733, %v663
        %v737 = vsel %vm735, %v734, %v664
        %vm738 = vcmask 850944
        %v739 = vsel %vm738, %v736, %v665
        %v740 = vsel %vm738, %v737, %v666
        %vm741 = vcmask 859136
        %v742 = vsel %vm741, %v739, 0.0
        %v743 = vsel %vm741, %v740, 0.0
        %744 = vst [vmem:[%s176] sm:$0xff] %v742
        %745 = vst [vmem:[%s176 + $0x8] sm:$0xff] %v743
        %s746 = sand.u32 %s75, 1
        %s747 = scalar_lea.sflag [#allocation4], %s746
        %s748 = sand.u32 %s75, 1
        %s749 = smul.addr %s748, 16
        %s750 = scalar_lea.vmem [#allocation7], %s749
        // Predicated region
        $region37: #{tpu_custom_call.1} parent=27 // pred_check
          %p751 = pneg %p85
        $region38: #{tpu_custom_call.1} parent=27 // pred_check_branch
          %753 = sbr.rel (%p751) target = $region40
        $region39: #{tpu_custom_call.1} parent=27 // pred_region
          %s754 = smul.u32 2, %s20
          %s756 = ssub.s32 256, 256
          %757 = vsyncadd %s747, %s756
          %s758 = smul.addr %s754, 128
          %s759 = scalar_lea.hbm %s2, %s758
          %s760 = sshll.u32 %s750, 4
          %s761 = int_to_ptr.vmem [resolvable:$true] %s760
          %766 = dma.vmem_to_hbm [thread:$0]  %s761, 256, %s759, %s747, 128, 128, 8
        $region40: #{tpu_custom_call.1} parent=27 // pred_fallthru
          _
      $region28: #{tpu_custom_call.1} parent=5 // pred_fallthru
        _
      %p767 = scmp.le.s32.totalorder 2, %s15
      // Predicated region
      $region41: #{tpu_custom_call.1} parent=5 // pred_check
        %p768 = pneg %p767
      $region42: #{tpu_custom_call.1} parent=5 // pred_check_branch
        %770 = sbr.rel (%p768) target = $region44
      $region43: #{tpu_custom_call.1} parent=5 // pred_region
        %s771 = ssub.s32 %s15, 2
        // Predicated region
        $region45: #{tpu_custom_call.1} parent=43 // pred_check
          %p772 = pneg %p91
        $region46: #{tpu_custom_call.1} parent=43 // pred_check_branch
          %774 = sbr.rel (%p772) target = $region48
        $region47: #{tpu_custom_call.1} parent=43 // pred_region
          %s775 = sand.u32 %s76, 1
          %s776 = scalar_lea.sflag [#allocation4], %s775
          %s777 = sand.u32 %s76, 1
          %s778 = smul.addr %s777, 16
          %s779 = scalar_lea.vmem [#allocation7], %s778
          %780 = dma.done %s776, 256
        $region48: #{tpu_custom_call.1} parent=43 // pred_fallthru
          _
      $region44: #{tpu_custom_call.1} parent=5 // pred_fallthru
        _
    $region6: #{tpu_custom_call.1} parent=1 // loop_footer
      %s19 = sadd.s32 1, %s15
    $region7: #{tpu_custom_call.1} parent=1 // loop_footer_branch
      %14 = sbr.rel target = $region3
    $region8: #{tpu_custom_call.1} parent=1 // loop_exit
      _
    %781 = vsyncpa [#allocation3], 1
    %s782 = scalar_lea.sflag [#allocation3], 1
    %783 = vsyncpa %s782, 1
    %784 = vsyncpa [#allocation6], 1
    %785 = vsyncpa [#allocation4], 1
    %s786 = scalar_lea.sflag [#allocation4], 1
    %787 = vsyncpa %s786, 1

</llo_original>
